<compile_context>
chip_gen: v7x
topology: tpu7x:2x2x1
jax: 0.10.0
libtpu: 0.0.40
codegen_flags: <defaults>
</compile_context>

<pallas_src>
import functools

import jax
import jax.numpy as jnp
from jax.experimental import pallas as pl
from jax.experimental.pallas import tpu as pltpu


def _round_up(x, m):
    return ((x + m - 1) // m) * m


def _make_fc_kernel(activation, dropout_p, has_mask, acc_in_out):
    if activation not in ("relu", "tanh", "linear"):
        raise ValueError(f"Activation {activation} is not supported")

    def kernel(*refs):
        if has_mask:
            x_ref, w_ref, b_ref, m_ref = refs[:4]
            rest = refs[4:]
        else:
            x_ref, w_ref, b_ref = refs[:3]
            m_ref = None
            rest = refs[3:]
        o_ref = rest[0]
        acc_ref = o_ref if acc_in_out else rest[1]

        # Grid queries at kernel top level only (never inside pl.when bodies).
        k = pl.program_id(2)
        nk = pl.num_programs(2)

        @pl.when(k == 0)
        def _():
            acc_ref[...] = jnp.zeros_like(acc_ref)

        acc_ref[...] += jnp.dot(
            x_ref[...], w_ref[...], preferred_element_type=jnp.float32
        )

        @pl.when(k == nk - 1)
        def _():
            # Epilogue only on the final K step, on the resident f32 accumulator.
            y = acc_ref[...] + b_ref[...]          # (TM, TN) + (1, TN) broadcast

            if activation == "relu":
                y = jnp.maximum(y, 0.0)
            elif activation == "tanh":
                y = jnp.tanh(y)                    # EUP slot, hidden under MXU work
            # "linear": identity

            if dropout_p > 0.0:
                keep = m_ref[...] >= jnp.float32(dropout_p)
                y = jnp.where(keep, y * (1.0 / (1.0 - dropout_p)), 0.0)

            o_ref[...] = y.astype(o_ref.dtype)

    return kernel


def fc_block(x, w, b, *, activation="relu", dropout=0.0, seed=0,
             tm=512, tn=1024, tk=512, use_bf16_matmul=False, out_dtype=None):
    """FCBlock forward: (B, D_in) @ (D_in, D_out) + b -> act -> dropout."""
    B, D_in = x.shape
    D_in_w, D_out = w.shape
    assert D_in == D_in_w
    assert b.shape == (D_out,)
    if activation not in ("relu", "tanh", "linear"):
        raise ValueError(f"Activation {activation} is not supported")

    out_dtype = jnp.dtype(out_dtype) if out_dtype is not None else x.dtype
    dropout_p = float(dropout)
    has_mask = dropout_p > 0.0
    acc_in_out = out_dtype == jnp.dtype(jnp.float32)   # accumulate directly in o_ref

    in_dtype = jnp.dtype(jnp.bfloat16) if use_bf16_matmul else x.dtype
    m_align = 16 if in_dtype == jnp.dtype(jnp.bfloat16) else 8

    B_a = _round_up(B, m_align)
    N_a = _round_up(D_out, 128)
    K_a = _round_up(D_in, 128)

    # Cap tiles to the (hardware-aligned) problem size.
    tm = _round_up(min(tm, B_a), m_align)
    tn = _round_up(min(tn, N_a), 128)
    tk = _round_up(min(tk, K_a), 128)

    # Guarantee >= 2 tiles along a "parallel" axis when possible so both v7x
    # TensorCores get work for small-batch shapes (grid (1,1,K) idles one core).
    if (B_a // tm) <= 1 and (N_a // tn) <= 1 and N_a >= 256:
        tn = _round_up((N_a + 1) // 2, 128)

    Mp = _round_up(B, tm)
    Np = _round_up(D_out, tn)
    Kp = _round_up(D_in, tk)
    grid = (Mp // tm, Np // tn, Kp // tk)

    # Cast in the wrapper (halves DMA bytes for bf16), pad only when needed.
    # TODO(synk): for a weight reused across forwards, hoist the cast/pad of w (and
    # b) out of the per-call wrapper and cache the padded array.
    xp = x if x.dtype == in_dtype else x.astype(in_dtype)
    wp = w if w.dtype == in_dtype else w.astype(in_dtype)
    if (Mp, Kp) != (B, D_in):
        xp = jnp.pad(xp, ((0, Mp - B), (0, Kp - D_in)))
    if (Kp, Np) != (D_in, D_out):
        wp = jnp.pad(wp, ((0, Kp - D_in), (0, Np - D_out)))
    bp = b.reshape(1, D_out).astype(jnp.float32)
    if Np != D_out:
        bp = jnp.pad(bp, ((0, 0), (0, Np - D_out)))

    operands = [xp, wp, bp]
    in_specs = [
        pl.BlockSpec((tm, tk), lambda i, j, k: (i, k)),   # x
        pl.BlockSpec((tk, tn), lambda i, j, k: (k, j)),   # w
        pl.BlockSpec((1, tn), lambda i, j, k: (0, j)),    # bias slice
    ]
    if has_mask:
        # Host-side uniforms (portable); block index ignores k -> fetched once per
        # (i, j) output tile, kept resident across the K reduction.
        mask_u = jax.random.uniform(
            jax.random.PRNGKey(int(seed)), (Mp, Np), dtype=jnp.float32
        )
        operands.append(mask_u)
        in_specs.append(pl.BlockSpec((tm, tn), lambda i, j, k: (i, j)))

    scratch_shapes = [] if acc_in_out else [pltpu.VMEM((tm, tn), jnp.float32)]

    kernel = _make_fc_kernel(activation, dropout_p, has_mask, acc_in_out)

    in_elt = jnp.dtype(in_dtype).itemsize
    out_elt = jnp.dtype(out_dtype).itemsize

    # VMEM budget: double-buffered tiles + optional f32 accumulator + headroom.
    vmem_bytes = (
        2 * tm * tk * in_elt
        + 2 * tk * tn * in_elt
        + 2 * tn * 4
        + 2 * tm * tn * out_elt
        + (2 * tm * tn * 4 if has_mask else 0)
        + (0 if acc_in_out else tm * tn * 4)
    )
    # Cap at 48 MiB: leaves headroom inside v7x's 64 MiB/TC; well under v5e/v6e 128 MiB.
    vmem_limit = int(min(max(vmem_bytes + (4 << 20), 16 << 20), 48 << 20))

    g_m, g_n, g_k = grid
    cost = pl.CostEstimate(
        flops=2 * Mp * Kp * Np,
        transcendentals=(Mp * Np if activation == "tanh" else 0),
        bytes_accessed=(
            in_elt * (g_n * Mp * Kp + g_m * Kp * Np)   # K-loop re-reads of x and w
            + out_elt * Mp * Np
            + (4 * Mp * Np if has_mask else 0)
            + 4 * Np
        ),
    )

    out_p = pl.pallas_call(
        kernel,
        out_shape=jax.ShapeDtypeStruct((Mp, Np), out_dtype),
        grid_spec=pltpu.PrefetchScalarGridSpec(
            num_scalar_prefetch=0,
            grid=grid,
            in_specs=in_specs,
            out_specs=pl.BlockSpec((tm, tn), lambda i, j, k: (i, j)),
            scratch_shapes=scratch_shapes,
        ),
        compiler_params=pltpu.CompilerParams(
            dimension_semantics=("parallel", "parallel", "arbitrary"),
            vmem_limit_bytes=vmem_limit,
        ),
        cost_estimate=cost,
    )(*operands)

    return out_p[:B, :D_out]


def _reference(x, w, b, activation):
    y = x @ w + b[None, :]
    if activation == "relu":
        y = jnp.maximum(y, 0.0)
    elif activation == "tanh":
        y = jnp.tanh(y)
    return y


if __name__ == "__main__":
    # Config implied by FCBlockConfig: input_dim=32, output_dim=32,
    # dropout=0.0 (-> Identity), activation='relu'.
    batch, input_dim, output_dim = 8, 32, 32

    key = jax.random.PRNGKey(0)
    kx, kw, kb = jax.random.split(key, 3)

    x = jax.random.normal(kx, (batch, input_dim), dtype=jnp.float32)
    # Deterministic nn.Linear-style init: U(-1/sqrt(fan_in), 1/sqrt(fan_in)).
    bound = 1.0 / (input_dim ** 0.5)
    w = jax.random.uniform(
        kw, (input_dim, output_dim), minval=-bound, maxval=bound, dtype=jnp.float32
    )
    b = jax.random.uniform(
        kb, (output_dim,), minval=-bound, maxval=bound, dtype=jnp.float32
    )

    # Case 1: relu + dropout=0 (Identity) — matches the module config, exact check.
    out = jax.block_until_ready(fc_block(x, w, b, activation="relu", dropout=0.0))
    ref = _reference(x, w, b, "relu")
    assert out.shape == (batch, output_dim)
    assert jnp.allclose(out, ref, atol=1e-4, rtol=1e-4)

    # Case 2: multi-tile grid (M/N/K all > one block, with padding + K reduction).
    B2, K2, N2 = 48, 200, 300
    k2x, k2w, k2b = jax.random.split(jax.random.PRNGKey(1), 3)
    x2 = jax.random.normal(k2x, (B2, K2), dtype=jnp.float32)
    w2 = jax.random.normal(k2w, (K2, N2), dtype=jnp.float32) * 0.05
    b2 = jax.random.normal(k2b, (N2,), dtype=jnp.float32) * 0.05
    out2 = jax.block_until_ready(
        fc_block(x2, w2, b2, activation="tanh", dropout=0.0, tm=32, tn=128, tk=128)
    )
    ref2 = _reference(x2, w2, b2, "tanh")
    assert out2.shape == (B2, N2)
    assert jnp.allclose(out2, ref2, atol=1e-4, rtol=1e-4)

    # Case 3: training-mode inverted dropout (host-side mask path).
    p = 0.25
    out3 = jax.block_until_ready(
        fc_block(x, w, b, activation="tanh", dropout=p, seed=42)
    )
    ref3 = _reference(x, w, b, "tanh")
    scaled = ref3 / (1.0 - p)
    elem_ok = jnp.isclose(out3, 0.0, atol=1e-6) | jnp.isclose(
        out3, scaled, atol=1e-3, rtol=1e-3
    )
    assert out3.shape == (batch, output_dim)
    assert bool(jnp.all(elem_ok))

    # Case 4: bf16 MXU operands (cast in wrapper), f32 accumulate — looser tolerance.
    out4 = jax.block_until_ready(
        fc_block(x, w, b, activation="relu", dropout=0.0, use_bf16_matmul=True)
    )
    assert jnp.allclose(out4, ref, atol=2e-2, rtol=2e-2)

    # Case 5: bf16 output (exercises the f32 VMEM-scratch accumulator path).
    out5 = jax.block_until_ready(
        fc_block(x, w, b, activation="relu", dropout=0.0, out_dtype=jnp.bfloat16)
    )
    assert out5.dtype == jnp.bfloat16
    assert jnp.allclose(out5.astype(jnp.float32), ref, atol=2e-2, rtol=2e-2)

    print("KERNEL_OK")
</pallas_src>

<mosaic_0001>
module attributes {stable_mosaic.version = 11 : i64} {
  func.func @kernel(%arg0: i32, %arg1: i32, %arg2: i32, %arg3: memref<8x128xf32, #tpu.memory_space<vmem>>, %arg4: memref<128x128xf32, #tpu.memory_space<vmem>>, %arg5: memref<1x128xf32, #tpu.memory_space<vmem>>, %arg6: memref<8x128xf32, #tpu.memory_space<vmem>>) attributes {dimension_semantics = [#tpu.dimension_semantics<parallel>, #tpu.dimension_semantics<parallel>, #tpu.dimension_semantics<arbitrary>], iteration_bounds = array<i64: 1, 1, 1>, scalar_prefetch = 0 : i64, scratch_operands = 0 : i64, tpu.core_type = #tpu.core_type<tc>, window_params = [{transform_indices = @transform_0, window_bounds = array<i64: 8, 128>}, {transform_indices = @transform_1, window_bounds = array<i64: 128, 128>}, {transform_indices = @transform_2, window_bounds = array<i64: 1, 128>}, {transform_indices = @transform_3, window_bounds = array<i64: 8, 128>}]} {
    %c0_i32 = arith.constant 0 : i32
    %0 = arith.cmpi eq, %arg2, %c0_i32 : i32
    %1 = arith.extui %0 : i1 to i32
    %c0_i32_0 = arith.constant 0 : i32
    %2 = arith.cmpi ne, %1, %c0_i32_0 : i32
    scf.if %2 {
      %cst_10 = arith.constant 0.000000e+00 : f32
      %12 = vector.broadcast %cst_10 : f32 to vector<8x128xf32>
      %c0_11 = arith.constant 0 : index
      %c0_12 = arith.constant 0 : index
      %13 = vector.load %arg6[%c0_11, %c0_12] : memref<8x128xf32, #tpu.memory_space<vmem>>, vector<8x128xf32>
      tpu.vector_store %arg6[%c0_11, %c0_12], %12 {strides = array<i32>} : memref<8x128xf32, #tpu.memory_space<vmem>>, vector<8x128xf32>,
    } else {
    }
    %c0 = arith.constant 0 : index
    %c0_1 = arith.constant 0 : index
    %3 = vector.load %arg6[%c0, %c0_1] : memref<8x128xf32, #tpu.memory_space<vmem>>, vector<8x128xf32>
    %c0_2 = arith.constant 0 : index
    %c0_3 = arith.constant 0 : index
    %4 = vector.load %arg3[%c0_2, %c0_3] : memref<8x128xf32, #tpu.memory_space<vmem>>, vector<8x128xf32>
    %c0_4 = arith.constant 0 : index
    %c0_5 = arith.constant 0 : index
    %5 = vector.load %arg4[%c0_4, %c0_5] : memref<128x128xf32, #tpu.memory_space<vmem>>, vector<128x128xf32>
    %cst = arith.constant dense<0.000000e+00> : vector<8x128xf32>
    %6 = tpu.matmul %4, %5, %cst {dimension_numbers = #tpu.dot_dimension_numbers<[1], [0], [0], [1], [0, 0, 1, 1], [], []>} : vector<8x128xf32>, vector<128x128xf32>, vector<8x128xf32> -> vector<8x128xf32>
    %7 = arith.addf %3, %6 : vector<8x128xf32>
    %c0_6 = arith.constant 0 : index
    %c0_7 = arith.constant 0 : index
    %8 = vector.load %arg6[%c0_6, %c0_7] : memref<8x128xf32, #tpu.memory_space<vmem>>, vector<8x128xf32>
    tpu.vector_store %arg6[%c0_6, %c0_7], %7 {strides = array<i32>} : memref<8x128xf32, #tpu.memory_space<vmem>>, vector<8x128xf32>,
    %c0_i32_8 = arith.constant 0 : i32
    %9 = arith.cmpi eq, %arg2, %c0_i32_8 : i32
    %10 = arith.extui %9 : i1 to i32
    %c0_i32_9 = arith.constant 0 : i32
    %11 = arith.cmpi ne, %10, %c0_i32_9 : i32
    scf.if %11 {
      %c0_10 = arith.constant 0 : index
      %c0_11 = arith.constant 0 : index
      %12 = vector.load %arg6[%c0_10, %c0_11] : memref<8x128xf32, #tpu.memory_space<vmem>>, vector<8x128xf32>
      %c0_12 = arith.constant 0 : index
      %c0_13 = arith.constant 0 : index
      %13 = vector.load %arg5[%c0_12, %c0_13] : memref<1x128xf32, #tpu.memory_space<vmem>>, vector<1x128xf32>
      %14 = vector.broadcast %13 : vector<1x128xf32> to vector<8x128xf32>
      %15 = arith.addf %12, %14 : vector<8x128xf32>
      %cst_14 = arith.constant 0.000000e+00 : f32
      %16 = vector.broadcast %cst_14 : f32 to vector<8x128xf32>
      %17 = arith.maximumf %15, %16 : vector<8x128xf32>
      %c0_15 = arith.constant 0 : index
      %c0_16 = arith.constant 0 : index
      %18 = vector.load %arg6[%c0_15, %c0_16] : memref<8x128xf32, #tpu.memory_space<vmem>>, vector<8x128xf32>
      tpu.vector_store %arg6[%c0_15, %c0_16], %17 {strides = array<i32>} : memref<8x128xf32, #tpu.memory_space<vmem>>, vector<8x128xf32>,
    } else {
    }
    return
  }
  func.func @transform_0(%arg0: i32, %arg1: i32, %arg2: i32) -> (i32, i32) {
    %c0_i32 = arith.constant 0 : i32
    return %arg0, %arg2 : i32, i32
  }
  func.func @transform_1(%arg0: i32, %arg1: i32, %arg2: i32) -> (i32, i32) {
    %c0_i32 = arith.constant 0 : i32
    return %arg2, %arg1 : i32, i32
  }
  func.func @transform_2(%arg0: i32, %arg1: i32, %arg2: i32) -> (i32, i32) {
    %c0_i32 = arith.constant 0 : i32
    %c0_i32_0 = arith.constant 0 : i32
    return %c0_i32, %arg1 : i32, i32
  }
  func.func @transform_3(%arg0: i32, %arg1: i32, %arg2: i32) -> (i32, i32) {
    %c0_i32 = arith.constant 0 : i32
    return %arg0, %arg1 : i32, i32
  }
}

</mosaic_0001>

<llo_original>
// kernel: tpu_custom_call.1
$region0: #{tpu_custom_call.1}
  #allocation0 [shape = 'u32[]', space=smem, size = 0x4, offset = 0x4, fixed_abs, tag = 'smem constant byte address 0x4 - core index']
  #allocation1 [shape = 'u32[144,128]{1,0:T(1,128)}', space=vmem, size = 0x12000, scoped, tag = 'internal scratch']
  %s0 = inlined_call_operand.hbm [shape: f32[8,128], index: 0, kind: input, shape index: {}]
  %s1 = inlined_call_operand.hbm [shape: f32[128,128], index: 1, kind: input, shape index: {}]
  %s2 = inlined_call_operand.vmem [shape: f32[1,128], index: 2, kind: input, shape index: {}]
  %s3 = inlined_call_operand.hbm [shape: f32[8,128], index: 3, kind: output, shape index: {}]
  %s4 = sld [smem:[#allocation0]]
  $region38: #{tpu_custom_call.1} parent=0
    _
  %s6 = ssub.s32 1, %s4
  %s7 = scalar_select 0, %s6, %s4
  $region1: #{tpu_custom_call.1} parent=0
    #allocation2 [shape = 'u8[4096]{0}', space=vmem, size = 0x1000, scoped, tag = 'input window, operand 0, single buffered']
    #allocation3 [shape = 's32[1]{0}', space=sflag, size = 0x4, scoped, tag = 'scoped memory for tpu_custom_call.1']
    #allocation4 [shape = 's32[1]{0}', space=sflag, size = 0x4, scoped, tag = 'scoped memory for tpu_custom_call.1']
    #allocation5 [shape = 'u8[65536]{0}', space=vmem, size = 0x10000, scoped, tag = 'input window, operand 1, single buffered']
    #allocation6 [shape = 's32[1]{0}', space=sflag, size = 0x4, scoped, tag = 'scoped memory for tpu_custom_call.1']
    #allocation7 [shape = 'u8[4096]{0}', space=vmem, size = 0x1000, scoped, tag = 'output window, operand 0, single buffered']
    %8 = vsyncpa [#allocation3], 0
    %9 = vsyncpa [#allocation6], 0
    %10 = vsyncpa [#allocation4], 0
    // Predicated region
    $region2: #{tpu_custom_call.1} parent=1 // pred_check
      _
    $region3: #{tpu_custom_call.1} parent=1 // pred_check_branch
      %12 = sbr.rel (0) target = $region5
    $region4: #{tpu_custom_call.1} parent=1 // pred_region
      %s14 = ssub.s32 128, 128
      %15 = vsyncadd [#allocation3], %s14
      %s17 = sshll.u32 [#allocation2], 4
      %s18 = int_to_ptr.vmem [resolvable:$true] %s17
      %20 = dma.hbm_to_vmem [thread:$0]  %s0, 128, %s18, [#allocation3]
    $region5: #{tpu_custom_call.1} parent=1 // pred_fallthru
      _
    // Predicated region
    $region6: #{tpu_custom_call.1} parent=1 // pred_check
      _
    $region7: #{tpu_custom_call.1} parent=1 // pred_check_branch
      %22 = sbr.rel (0) target = $region9
    $region8: #{tpu_custom_call.1} parent=1 // pred_region
      %s24 = ssub.s32 2048, 2048
      %25 = vsyncadd [#allocation6], %s24
      %s26 = sshll.u32 [#allocation5], 4
      %s27 = int_to_ptr.vmem [resolvable:$true] %s26
      %32 = dma.hbm_to_vmem [thread:$0]  %s1, 2048, %s27, [#allocation6], 128, 128, 8
    $region9: #{tpu_custom_call.1} parent=1 // pred_fallthru
      _
    // Predicated region
    $region10: #{tpu_custom_call.1} parent=1 // pred_check
      _
    $region11: #{tpu_custom_call.1} parent=1 // pred_check_branch
      %34 = sbr.rel (0) target = $region13
    $region12: #{tpu_custom_call.1} parent=1 // pred_region
      _
    $region13: #{tpu_custom_call.1} parent=1 // pred_fallthru
      _
    // Predicated region
    $region14: #{tpu_custom_call.1} parent=1 // pred_check
      _
    $region15: #{tpu_custom_call.1} parent=1 // pred_check_branch
      %36 = sbr.rel (0) target = $region17
    $region16: #{tpu_custom_call.1} parent=1 // pred_region
      %37 = dma.done [#allocation3], 128
    $region17: #{tpu_custom_call.1} parent=1 // pred_fallthru
      _
    // Predicated region
    $region18: #{tpu_custom_call.1} parent=1 // pred_check
      _
    $region19: #{tpu_custom_call.1} parent=1 // pred_check_branch
      %39 = sbr.rel (0) target = $region21
    $region20: #{tpu_custom_call.1} parent=1 // pred_region
      %40 = dma.done [#allocation6], 2048
    $region21: #{tpu_custom_call.1} parent=1 // pred_fallthru
      _
    %p41 = scmp.eq.s32.totalorder 0, 0
    // Predicated region
    $region22: #{tpu_custom_call.1} parent=1 // pred_check
      %p42 = pneg %p41
    $region23: #{tpu_custom_call.1} parent=1 // pred_check_branch
      %44 = sbr.rel (%p42) target = $region25
    $region24: #{tpu_custom_call.1} parent=1 // pred_region
      %45 = vst [vmem:[#allocation7] sm:$0xff] 0.0
    $region25: #{tpu_custom_call.1} parent=1 // pred_fallthru
      _
    %v46 = vld [vmem:[#allocation7] sm:$0xff]
    %v47 = vld [vmem:[#allocation2] sm:$0xff]
    %v48 = vld [vmem:[#allocation5] sm:$0xff]
    %v49 = vld [vmem:[#allocation5 + $0x8] sm:$0xff]
    %v50 = vld [vmem:[#allocation5 + $0x10] sm:$0xff]
    %v51 = vld [vmem:[#allocation5 + $0x18] sm:$0xff]
    %v52 = vld [vmem:[#allocation5 + $0x20] sm:$0xff]
    %v53 = vld [vmem:[#allocation5 + $0x28] sm:$0xff]
    %v54 = vld [vmem:[#allocation5 + $0x30] sm:$0xff]
    %v55 = vld [vmem:[#allocation5 + $0x38] sm:$0xff]
    %v56 = vld [vmem:[#allocation5 + $0x40] sm:$0xff]
    %v57 = vld [vmem:[#allocation5 + $0x48] sm:$0xff]
    %v58 = vld [vmem:[#allocation5 + $0x50] sm:$0xff]
    %v59 = vld [vmem:[#allocation5 + $0x58] sm:$0xff]
    %v60 = vld [vmem:[#allocation5 + $0x60] sm:$0xff]
    %v61 = vld [vmem:[#allocation5 + $0x68] sm:$0xff]
    %v62 = vld [vmem:[#allocation5 + $0x70] sm:$0xff]
    %v63 = vld [vmem:[#allocation5 + $0x78] sm:$0xff]
    %64 = vmatprep.subr.mxu0 0.0
    %65 = vmatpush1.msra.mxu0 %v48
    %66 = vmatprep.subr.mxu0 0.0
    %67 = vmatpush1.msra.mxu0 %v49
    %68 = vmatprep.subr.mxu0 0.0
    %69 = vmatpush1.msra.mxu0 %v50
    %70 = vmatprep.subr.mxu0 0.0
    %71 = vmatpush1.msra.mxu0 %v51
    %72 = vmatprep.subr.mxu0 0.0
    %73 = vmatpush1.msra.mxu0 %v52
    %74 = vmatprep.subr.mxu0 0.0
    %75 = vmatpush1.msra.mxu0 %v53
    %76 = vmatprep.subr.mxu0 0.0
    %77 = vmatpush1.msra.mxu0 %v54
    %78 = vmatprep.subr.mxu0 0.0
    %79 = vmatpush1.msra.mxu0 %v55
    %80 = vmatprep.subr.mxu0 0.0
    %81 = vmatpush1.msra.mxu0 %v56
    %82 = vmatprep.subr.mxu0 0.0
    %83 = vmatpush1.msra.mxu0 %v57
    %84 = vmatprep.subr.mxu0 0.0
    %85 = vmatpush1.msra.mxu0 %v58
    %86 = vmatprep.subr.mxu0 0.0
    %87 = vmatpush1.msra.mxu0 %v59
    %88 = vmatprep.subr.mxu0 0.0
    %89 = vmatpush1.msra.mxu0 %v60
    %90 = vmatprep.subr.mxu0 0.0
    %91 = vmatpush1.msra.mxu0 %v61
    %92 = vmatprep.subr.mxu0 0.0
    %93 = vmatpush1.msra.mxu0 %v62
    %94 = vmatprep.subr.mxu0 0.0
    %95 = vmatpush1.msra.mxu0 %v63
    %96 = vmatprep.subr.mxu0 0.0
    %97 = vmatpush1.msra.mxu0 0.0
    %98 = vmatprep.subr.mxu0 0.0
    %99 = vmatpush1.msra.mxu0 0.0
    %100 = vmatprep.subr.mxu0 0.0
    %101 = vmatpush1.msra.mxu0 0.0
    %102 = vmatprep.subr.mxu0 0.0
    %103 = vmatpush1.msra.mxu0 0.0
    %104 = vmatprep.subr.mxu0 0.0
    %105 = vmatpush1.msra.mxu0 0.0
    %106 = vmatprep.subr.mxu0 0.0
    %107 = vmatpush1.msra.mxu0 0.0
    %108 = vmatprep.subr.mxu0 0.0
    %109 = vmatpush1.msra.mxu0 0.0
    %110 = vmatprep.subr.mxu0 0.0
    %111 = vmatpush1.msra.mxu0 0.0
    %112 = vmatprep.subr.mxu0 0.0
    %113 = vmatpush1.msra.mxu0 0.0
    %114 = vmatprep.subr.mxu0 0.0
    %115 = vmatpush1.msra.mxu0 0.0
    %116 = vmatprep.subr.mxu0 0.0
    %117 = vmatpush1.msra.mxu0 0.0
    %118 = vmatprep.subr.mxu0 0.0
    %119 = vmatpush1.msra.mxu0 0.0
    %120 = vmatprep.subr.mxu0 0.0
    %121 = vmatpush1.msra.mxu0 0.0
    %122 = vmatprep.subr.mxu0 0.0
    %123 = vmatpush1.msra.mxu0 0.0
    %124 = vmatprep.subr.mxu0 0.0
    %125 = vmatpush1.msra.mxu0 0.0
    %126 = vmatprep.subr.mxu0 0.0
    %127 = vmatpush1.msra.mxu0 0.0
    %128 = vmatprep.mubr.f32.mxu0 0.0
    %129 = vmatmul.mubr.f32.gmra.mrb[0].mxu0 %v47
    %v130 = vpop.f32.mrb[0].mxu0
    %v131 = vadd.f32 0.0, %v130
    %v132 = vpop.f32.mrb[0].mxu0
    %133 = vdwg.mxu0
    %v134 = vadd.f32 %v46, %v131
    %135 = vst [vmem:[#allocation7] sm:$0xff] %v134
    // Predicated region
    $region26: #{tpu_custom_call.1} parent=1 // pred_check
      %p136 = pneg %p41
    $region27: #{tpu_custom_call.1} parent=1 // pred_check_branch
      %138 = sbr.rel (%p136) target = $region29
    $region28: #{tpu_custom_call.1} parent=1 // pred_region
      %v139 = vld [vmem:[#allocation7] sm:$0xff]
      %v140 = vld [vmem:[%s2] sm:$0x1]
      %v142 = vlaneseq
      %v143 = vshrl.u32 %v142, 7
      %v144 = vsub.s32 0, %v143
      %v145 = vrot.slane %v140, %v144
      %v147 = vadd.f32 %v139, %v145
      %v148 = vmax.f32 %v147, 0.0
      %149 = vst [vmem:[#allocation7] sm:$0xff] %v148
    $region29: #{tpu_custom_call.1} parent=1 // pred_fallthru
      _
    // Predicated region
    $region30: #{tpu_custom_call.1} parent=1 // pred_check
      _
    $region31: #{tpu_custom_call.1} parent=1 // pred_check_branch
      %151 = sbr.rel (0) target = $region33
    $region32: #{tpu_custom_call.1} parent=1 // pred_region
      %s153 = ssub.s32 128, 128
      %154 = vsyncadd [#allocation4], %s153
      %s156 = sshll.u32 [#allocation7], 4
      %s157 = int_to_ptr.vmem [resolvable:$true] %s156
      %159 = dma.vmem_to_hbm [thread:$0]  %s157, 128, %s3, [#allocation4]
    $region33: #{tpu_custom_call.1} parent=1 // pred_fallthru
      _
    // Predicated region
    $region34: #{tpu_custom_call.1} parent=1 // pred_check
      _
    $region35: #{tpu_custom_call.1} parent=1 // pred_check_branch
      %161 = sbr.rel (0) target = $region37
    $region36: #{tpu_custom_call.1} parent=1 // pred_region
      %162 = dma.done [#allocation4], 128
    $region37: #{tpu_custom_call.1} parent=1 // pred_fallthru
      _
    %163 = vsyncpa [#allocation3], 1
    %164 = vsyncpa [#allocation6], 1
    %165 = vsyncpa [#allocation4], 1

</llo_original>
